<compile_context>
chip_gen: v6e
topology: v6e:2x2x1
jax: 0.10.0
libtpu: 0.0.40
codegen_flags: <defaults>
</compile_context>

<pallas_src>
import functools

import jax
import jax.numpy as jnp
import numpy as np
from jax.experimental import pallas as pl
from jax.experimental.pallas import tpu as pltpu


def _round_up(n, k):
    return ((n + k - 1) // k) * k


@functools.lru_cache(maxsize=None)
def _tpu_kind():
    try:
        return jax.devices()[0].device_kind.lower()
    except Exception:
        return ""


def _bf16_eup_available():
    # v6e / v7x have a bf16 EUP path; v5e and older do not (keep f32 there).
    k = _tpu_kind()
    return ("v6" in k) or ("v7" in k) or ("7x" in k)


def _vmem_capacity_bytes():
    """Generation-aware physical VMEM per TensorCore."""
    try:
        cap = int(pltpu.get_tpu_info().vmem_capacity_bytes)
        if cap > 0:
            return cap
    except Exception:
        pass
    k = _tpu_kind()
    if ("v7" in k) or ("7x" in k):
        return 64 * 2**20
    if ("v4" in k) or ("v5" in k) or ("v6" in k):
        return 128 * 2**20
    return 64 * 2**20  # unknown generation: be conservative


def _transpose_probe_kernel(x_ref, o_ref):
    o_ref[...] = jnp.transpose(x_ref[...])


@functools.lru_cache(maxsize=None)
def _in_kernel_transpose_ok(m):
    """Probe whether Mosaic lowers an (m, 128k)->(128k, m) f32 XLU transpose."""
    try:
        f = pl.pallas_call(
            _transpose_probe_kernel,
            out_shape=jax.ShapeDtypeStruct((256, int(m)), jnp.float32),
        )
        jax.block_until_ready(f(jnp.zeros((int(m), 256), jnp.float32)))
        return True
    except Exception:
        return False


def _antideriv_tanh(z, use_bf16_trans):
    # torch: abs(z) + log(1 + exp(-2*abs(z)))   (log1p for precision)
    a = jnp.abs(z)
    if not use_bf16_trans:
        return a + jnp.log1p(jnp.exp(-2.0 * a))
    # v6e/v7x: run the two transcendentals on the bf16 EUP path; |z| and the
    # final add (and everything downstream) stay in f32.
    t = jnp.exp((-2.0 * a).astype(jnp.bfloat16))
    return a + jnp.log1p(t).astype(jnp.float32)


def _resnn_kernel(xT_ref, w0_ref, b0_ref, wh_ref, bh_ref, o_ref, *,
                  n_hidden, step, use_bf16_trans, fuse_output_transpose):
    """One lane-dense batch tile of the full ResNN forward.

    xT_ref: (d+1, TN)   input tile, batch on the 128-lane axis
    w0_ref: (m, d+1)    first layer weight (native torch (out, in) layout)
    b0_ref: (m, 1)      first layer bias (lane-broadcast)
    wh_ref: (L, m, m)   hidden layer weights, L = n_layers - 1
    bh_ref: (L, m, 1)   hidden layer biases
    o_ref : (TN, m) if fuse_output_transpose else (m, TN)
    """
    xT = xT_ref[...]

    # opening layer + activation:  y = act(W0 @ x^T + b0)   -> (m, TN)
    y = jnp.dot(w0_ref[...], xT, preferred_element_type=jnp.float32)
    y = _antideriv_tanh(y + b0_ref[...], use_bf16_trans)

    # residual hidden layers
    # TODO(synk): cast MXU operands to bf16 on v6e/v7x; MXU has huge slack so
    # this only frees the vex slot (low priority per review).
    if n_hidden <= 8:
        # small static trip count -> fully unrolled (LLO scheduler visibility)
        for i in range(n_hidden):
            z = jnp.dot(wh_ref[i], y, preferred_element_type=jnp.float32)
            y = y + step * _antideriv_tanh(z + bh_ref[i], use_bf16_trans)
    else:
        # large L: bound live ranges / code size with a real loop and dynamic
        # first-axis indexing of the resident weight stack.
        def body(i, y):
            z = jnp.dot(wh_ref[i], y, preferred_element_type=jnp.float32)
            return y + step * _antideriv_tanh(z + bh_ref[i], use_bf16_trans)

        y = jax.lax.fori_loop(0, n_hidden, body, y)

    if fuse_output_transpose:
        # transpose on the otherwise-idle XLU; store the (TN, m) block that the
        # (nex, m) result layout wants -> no wrapper-side transpose pass.
        o_ref[...] = jnp.transpose(y).astype(o_ref.dtype)
    else:
        o_ref[...] = y.astype(o_ref.dtype)


def resnn_forward(x, w0, b0, wh, bh, *, n_layers, tile_n=None,
                  use_bf16_trans=None, fuse_output_transpose=None):
    """Pallas ResNN forward.

    x : (nex, d+1)    w0: (m, d+1)   b0: (m,)
    wh: (L, m, m)     bh: (L, m)     with L = n_layers - 1
    Returns (nex, m), matching the PyTorch module.
    """
    if n_layers < 2:
        raise ValueError("n_layers must be an integer >= 2")
    nex, dp1 = x.shape
    m = w0.shape[0]
    L = n_layers - 1
    assert w0.shape == (m, dp1)
    assert b0.shape == (m,)
    assert wh.shape == (L, m, m)
    assert bh.shape == (L, m)
    step = 1.0 / (n_layers - 1)

    if use_bf16_trans is None:
        use_bf16_trans = _bf16_eup_available()
    if fuse_output_transpose is None:
        fuse_output_transpose = _in_kernel_transpose_ok(int(m))

    # ---- generation-aware VMEM budget --------------------------------------
    vmem_cap = _vmem_capacity_bytes()
    vmem_budget = int(min(vmem_cap - 12 * 2**20, 100 * 2**20))

    # per-batch-lane VMEM bytes (f32), incl. lane/sublane padding:
    sub_d = _round_up(dp1, 8)            # x^T tile sublane padding
    sub_m = _round_up(m, 8)
    lane_m = _round_up(m, 128)           # (tile_n, m) blocks pad m to 128 lanes
    out_lanes = (3 * lane_m) if fuse_output_transpose else (2 * sub_m)
    bytes_per_lane = 4 * (2 * sub_d + 6 * sub_m + out_lanes)
    weight_bytes = 2 * 4 * (dp1 * m + L * m * m + m * (L + 1))  # double-buffered
    usable = int(0.7 * vmem_budget) - weight_bytes
    vmem_tile_cap = max(128, (max(usable, 0) // bytes_per_lane) // 128 * 128)
    # TODO(synk): for very large L*m^2 stream hidden weights via a (batch, L)
    # grid instead of keeping all of them resident.

    # ---- batch tiling: lane axis, large multiples of 128 --------------------
    nex_128 = _round_up(max(nex, 1), 128)
    if tile_n is None:
        # big tiles amortize the ~0.35us per-grid-step overhead (review item 1)
        tile_n = min(16384, nex_128, vmem_tile_cap)
    tile_n = max(128, (int(tile_n) // 128) * 128)
    tile_n = min(tile_n, vmem_tile_cap)

    # keep >= 2 grid steps (>= 4 on v7x, which has 2 TensorCores) when possible
    k = _tpu_kind()
    min_steps = 4 if (("v7" in k) or ("7x" in k)) else 2
    while tile_n > 128 and pl.cdiv(nex_128, tile_n) < min_steps:
        tile_n = max(128, (tile_n // 2 // 128) * 128)

    nex_p = _round_up(max(nex, 1), tile_n)
    grid = (nex_p // tile_n,)

    # x^T so batch sits on the 128-lane axis (kept in the wrapper on purpose;
    # see module docstring), fused with the ragged-batch zero pad.
    if nex_p == nex:
        xT = x.T
    else:
        xT = jnp.zeros((dp1, nex_p), x.dtype).at[:, :nex].set(x.T)
    b0c = b0[:, None]        # (m, 1): lane-broadcast in-kernel
    bhc = bh[:, :, None]     # (L, m, 1)

    kernel = functools.partial(
        _resnn_kernel, n_hidden=L, step=step,
        use_bf16_trans=bool(use_bf16_trans),
        fuse_output_transpose=bool(fuse_output_transpose))

    cost = pl.CostEstimate(
        flops=2 * nex_p * (dp1 * m + L * m * m),
        transcendentals=2 * nex_p * m * (L + 1),
        bytes_accessed=4 * (nex_p * dp1 + nex_p * m + dp1 * m + L * m * m
                            + m * (L + 1)),
    )

    in_specs = [
        pl.BlockSpec((dp1, tile_n), lambda i: (0, i)),   # x^T tile
        pl.BlockSpec((m, dp1), lambda i: (0, 0)),        # W0 (grid-invariant)
        pl.BlockSpec((m, 1), lambda i: (0, 0)),          # b0
        pl.BlockSpec((L, m, m), lambda i: (0, 0, 0)),    # hidden W
        pl.BlockSpec((L, m, 1), lambda i: (0, 0, 0)),    # hidden b
    ]
    # TODO(synk): mark the grid-invariant weight specs pipeline_mode=pl.Buffered(1)
    # once the minimum supported JAX version has it (minor VMEM saving only).

    if fuse_output_transpose:
        out_shape = jax.ShapeDtypeStruct((nex_p, m), x.dtype)
        out_spec = pl.BlockSpec((tile_n, m), lambda i: (i, 0))
    else:
        out_shape = jax.ShapeDtypeStruct((m, nex_p), x.dtype)
        out_spec = pl.BlockSpec((m, tile_n), lambda i: (0, i))

    y = pl.pallas_call(
        kernel,
        out_shape=out_shape,
        grid_spec=pltpu.PrefetchScalarGridSpec(
            num_scalar_prefetch=0,
            grid=grid,
            in_specs=in_specs,
            out_specs=out_spec,
        ),
        compiler_params=pltpu.CompilerParams(
            # "parallel" lets megacore / v7x shard the batch axis; CORE_PARALLEL
            # was considered but kept off for portability across JAX versions.
            dimension_semantics=("parallel",),
            vmem_limit_bytes=vmem_budget,
        ),
        cost_estimate=cost,
    )(xT, w0, b0c, wh, bhc)

    if fuse_output_transpose:
        return y if nex_p == nex else y[:nex]
    # fallback path (in-kernel transpose unsupported on this Mosaic version)
    return y.T[:nex]


def resnn_reference(x, w0, b0, wh, bh, *, n_layers):
    """Pure-JAX reference mirroring the PyTorch forward (torch layouts)."""
    h = 1.0 / (n_layers - 1)

    def act(z):
        a = jnp.abs(z)
        return a + jnp.log1p(jnp.exp(-2.0 * a))

    y = act(x @ w0.T + b0)
    for i in range(n_layers - 1):
        y = y + h * act(y @ wh[i].T + bh[i])
    return y


if __name__ == "__main__":
    # small shapes consistent with the module: d=3 => input dim d+1=4, m=32
    d = 3
    m = 32
    n_layers = 3
    nex = 200          # ragged on purpose: exercises padding + a 2-step grid

    key = jax.random.PRNGKey(0)
    kx, k0w, k0b, k1w, k1b = jax.random.split(key, 5)

    x = jax.random.normal(kx, (nex, d + 1), dtype=jnp.float32)

    # deterministic parameter init (uniform +-1/sqrt(fan_in), like nn.Linear),
    # stored in native torch (out, in) layout.
    bound0 = 1.0 / np.sqrt(d + 1)
    w0 = jax.random.uniform(k0w, (m, d + 1), jnp.float32, -bound0, bound0)
    b0 = jax.random.uniform(k0b, (m,), jnp.float32, -bound0, bound0)

    bound1 = 1.0 / np.sqrt(m)
    w1 = jax.random.uniform(k1w, (m, m), jnp.float32, -bound1, bound1)
    b1 = jax.random.uniform(k1b, (m,), jnp.float32, -bound1, bound1)

    # layers[2:] in the PyTorch module are deep copies of layers[1] at init:
    L = n_layers - 1
    wh = jnp.stack([w1] * L)
    bh = jnp.stack([b1] * L)

    use_bf16 = _bf16_eup_available()
    out = resnn_forward(x, w0, b0, wh, bh, n_layers=n_layers,
                        use_bf16_trans=use_bf16)
    out = jax.block_until_ready(out)

    ref = resnn_reference(x, w0, b0, wh, bh, n_layers=n_layers)
    if use_bf16:
        # bf16 EUP transcendentals (v6e/v7x) -> relaxed tolerance per review
        rtol, atol = 1e-2, 5e-2
    else:
        rtol, atol = 1e-5, 1e-5
    np.testing.assert_allclose(np.asarray(out), np.asarray(ref),
                               rtol=rtol, atol=atol)

    print("KERNEL_OK")
</pallas_src>

<mosaic_0001>
module attributes {stable_mosaic.version = 11 : i64} {
  func.func @_transpose_probe_kernel(%arg0: memref<32x256xf32, #tpu.memory_space<vmem>>, %arg1: memref<256x32xf32, #tpu.memory_space<vmem>>) attributes {dimension_semantics = [], scalar_prefetch = 0 : i64, scratch_operands = 0 : i64, tpu.core_type = #tpu.core_type<tc>} {
    %c0 = arith.constant 0 : index
    %c0_0 = arith.constant 0 : index
    %0 = vector.load %arg0[%c0, %c0_0] : memref<32x256xf32, #tpu.memory_space<vmem>>, vector<32x256xf32>
    %1 = tpu.transpose %0, [1, 0] : vector<32x256xf32> -> vector<256x32xf32>
    %c0_1 = arith.constant 0 : index
    %c0_2 = arith.constant 0 : index
    %2 = vector.load %arg1[%c0_1, %c0_2] : memref<256x32xf32, #tpu.memory_space<vmem>>, vector<256x32xf32>
    tpu.vector_store %arg1[%c0_1, %c0_2], %1 {strides = array<i32>} : memref<256x32xf32, #tpu.memory_space<vmem>>, vector<256x32xf32>,
    return
  }
}

module attributes {stable_mosaic.version = 11 : i64} {
  func.func @_resnn_kernel(%arg0: i32, %arg1: memref<4x128xf32, #tpu.memory_space<vmem>>, %arg2: memref<32x4xf32, #tpu.memory_space<vmem>>, %arg3: memref<32x1xf32, #tpu.memory_space<vmem>>, %arg4: memref<2x32x32xf32, #tpu.memory_space<vmem>>, %arg5: memref<2x32x1xf32, #tpu.memory_space<vmem>>, %arg6: memref<32x128xf32, #tpu.memory_space<vmem>>) attributes {dimension_semantics = [#tpu.dimension_semantics<parallel>], iteration_bounds = array<i64: 2>, scalar_prefetch = 0 : i64, scratch_operands = 0 : i64, tpu.core_type = #tpu.core_type<tc>, window_params = [{transform_indices = @transform_0, window_bounds = array<i64: 4, 128>}, {pipeline_mode = #tpu.pipeline_mode<synchronous>, transform_indices = @transform_1, window_bounds = array<i64: 32, 4>}, {pipeline_mode = #tpu.pipeline_mode<synchronous>, transform_indices = @transform_2, window_bounds = array<i64: 32, 1>}, {pipeline_mode = #tpu.pipeline_mode<synchronous>, transform_indices = @transform_3, window_bounds = array<i64: 2, 32, 32>}, {pipeline_mode = #tpu.pipeline_mode<synchronous>, transform_indices = @transform_4, window_bounds = array<i64: 2, 32, 1>}, {transform_indices = @transform_5, window_bounds = array<i64: 32, 128>}]} {
    %c0 = arith.constant 0 : index
    %c0_0 = arith.constant 0 : index
    %0 = vector.load %arg1[%c0, %c0_0] : memref<4x128xf32, #tpu.memory_space<vmem>>, vector<4x128xf32>
    %c0_1 = arith.constant 0 : index
    %c0_2 = arith.constant 0 : index
    %1 = vector.load %arg2[%c0_1, %c0_2] : memref<32x4xf32, #tpu.memory_space<vmem>>, vector<32x4xf32>
    %cst = arith.constant dense<0.000000e+00> : vector<32x128xf32>
    %2 = tpu.matmul %1, %0, %cst {dimension_numbers = #tpu.dot_dimension_numbers<[1], [0], [0], [1], [0, 0, 1, 1], [], []>} : vector<32x4xf32>, vector<4x128xf32>, vector<32x128xf32> -> vector<32x128xf32>
    %c0_3 = arith.constant 0 : index
    %c0_4 = arith.constant 0 : index
    %3 = vector.load %arg3[%c0_3, %c0_4] : memref<32x1xf32, #tpu.memory_space<vmem>>, vector<32x1xf32>
    %4 = vector.broadcast %3 : vector<32x1xf32> to vector<32x128xf32>
    %5 = arith.addf %2, %4 : vector<32x128xf32>
    %6 = math.absf %5 : vector<32x128xf32>
    %cst_5 = arith.constant -2.000000e+00 : f32
    %7 = vector.broadcast %cst_5 : f32 to vector<32x128xf32>
    %8 = arith.mulf %7, %6 : vector<32x128xf32>
    %9 = math.exp %8 : vector<32x128xf32>
    %10 = math.log1p %9 : vector<32x128xf32>
    %11 = arith.addf %6, %10 : vector<32x128xf32>
    %c0_6 = arith.constant 0 : index
    %c0_7 = arith.constant 0 : index
    %c0_8 = arith.constant 0 : index
    %12 = vector.load %arg4[%c0_6, %c0_7, %c0_8] : memref<2x32x32xf32, #tpu.memory_space<vmem>>, vector<1x32x32xf32>
    %13 = vector.shape_cast %12 : vector<1x32x32xf32> to vector<32x32xf32>
    %cst_9 = arith.constant dense<0.000000e+00> : vector<32x128xf32>
    %14 = tpu.matmul %13, %11, %cst_9 {dimension_numbers = #tpu.dot_dimension_numbers<[1], [0], [0], [1], [0, 0, 1, 1], [], []>} : vector<32x32xf32>, vector<32x128xf32>, vector<32x128xf32> -> vector<32x128xf32>
    %c0_10 = arith.constant 0 : index
    %c0_11 = arith.constant 0 : index
    %c0_12 = arith.constant 0 : index
    %15 = vector.load %arg5[%c0_10, %c0_11, %c0_12] : memref<2x32x1xf32, #tpu.memory_space<vmem>>, vector<1x32x1xf32>
    %16 = vector.shape_cast %15 : vector<1x32x1xf32> to vector<32x1xf32>
    %17 = vector.broadcast %16 : vector<32x1xf32> to vector<32x128xf32>
    %18 = arith.addf %14, %17 : vector<32x128xf32>
    %19 = math.absf %18 : vector<32x128xf32>
    %cst_13 = arith.constant -2.000000e+00 : f32
    %20 = vector.broadcast %cst_13 : f32 to vector<32x128xf32>
    %21 = arith.mulf %20, %19 : vector<32x128xf32>
    %22 = math.exp %21 : vector<32x128xf32>
    %23 = math.log1p %22 : vector<32x128xf32>
    %24 = arith.addf %19, %23 : vector<32x128xf32>
    %cst_14 = arith.constant 5.000000e-01 : f32
    %25 = vector.broadcast %cst_14 : f32 to vector<32x128xf32>
    %26 = arith.mulf %25, %24 : vector<32x128xf32>
    %27 = arith.addf %11, %26 : vector<32x128xf32>
    %c1 = arith.constant 1 : index
    %c0_15 = arith.constant 0 : index
    %c0_16 = arith.constant 0 : index
    %28 = vector.load %arg4[%c1, %c0_15, %c0_16] : memref<2x32x32xf32, #tpu.memory_space<vmem>>, vector<1x32x32xf32>
    %29 = vector.shape_cast %28 : vector<1x32x32xf32> to vector<32x32xf32>
    %cst_17 = arith.constant dense<0.000000e+00> : vector<32x128xf32>
    %30 = tpu.matmul %29, %27, %cst_17 {dimension_numbers = #tpu.dot_dimension_numbers<[1], [0], [0], [1], [0, 0, 1, 1], [], []>} : vector<32x32xf32>, vector<32x128xf32>, vector<32x128xf32> -> vector<32x128xf32>
    %c1_18 = arith.constant 1 : index
    %c0_19 = arith.constant 0 : index
    %c0_20 = arith.constant 0 : index
    %31 = vector.load %arg5[%c1_18, %c0_19, %c0_20] : memref<2x32x1xf32, #tpu.memory_space<vmem>>, vector<1x32x1xf32>
    %32 = vector.shape_cast %31 : vector<1x32x1xf32> to vector<32x1xf32>
    %33 = vector.broadcast %32 : vector<32x1xf32> to vector<32x128xf32>
    %34 = arith.addf %30, %33 : vector<32x128xf32>
    %35 = math.absf %34 : vector<32x128xf32>
    %cst_21 = arith.constant -2.000000e+00 : f32
    %36 = vector.broadcast %cst_21 : f32 to vector<32x128xf32>
    %37 = arith.mulf %36, %35 : vector<32x128xf32>
    %38 = math.exp %37 : vector<32x128xf32>
    %39 = math.log1p %38 : vector<32x128xf32>
    %40 = arith.addf %35, %39 : vector<32x128xf32>
    %cst_22 = arith.constant 5.000000e-01 : f32
    %41 = vector.broadcast %cst_22 : f32 to vector<32x128xf32>
    %42 = arith.mulf %41, %40 : vector<32x128xf32>
    %43 = arith.addf %27, %42 : vector<32x128xf32>
    %c0_23 = arith.constant 0 : index
    %c0_24 = arith.constant 0 : index
    %44 = vector.load %arg6[%c0_23, %c0_24] : memref<32x128xf32, #tpu.memory_space<vmem>>, vector<32x128xf32>
    tpu.vector_store %arg6[%c0_23, %c0_24], %43 {strides = array<i32>} : memref<32x128xf32, #tpu.memory_space<vmem>>, vector<32x128xf32>,
    return
  }
  func.func @transform_0(%arg0: i32) -> (i32, i32) {
    %c0_i32 = arith.constant 0 : i32
    %c0_i32_0 = arith.constant 0 : i32
    return %c0_i32, %arg0 : i32, i32
  }
  func.func @transform_1(%arg0: i32) -> (i32, i32) {
    %c0_i32 = arith.constant 0 : i32
    %c0_i32_0 = arith.constant 0 : i32
    %c0_i32_1 = arith.constant 0 : i32
    return %c0_i32, %c0_i32_0 : i32, i32
  }
  func.func @transform_2(%arg0: i32) -> (i32, i32) {
    %c0_i32 = arith.constant 0 : i32
    %c0_i32_0 = arith.constant 0 : i32
    %c0_i32_1 = arith.constant 0 : i32
    return %c0_i32, %c0_i32_0 : i32, i32
  }
  func.func @transform_3(%arg0: i32) -> (i32, i32, i32) {
    %c0_i32 = arith.constant 0 : i32
    %c0_i32_0 = arith.constant 0 : i32
    %c0_i32_1 = arith.constant 0 : i32
    %c0_i32_2 = arith.constant 0 : i32
    return %c0_i32, %c0_i32_0, %c0_i32_1 : i32, i32, i32
  }
  func.func @transform_4(%arg0: i32) -> (i32, i32, i32) {
    %c0_i32 = arith.constant 0 : i32
    %c0_i32_0 = arith.constant 0 : i32
    %c0_i32_1 = arith.constant 0 : i32
    %c0_i32_2 = arith.constant 0 : i32
    return %c0_i32, %c0_i32_0, %c0_i32_1 : i32, i32, i32
  }
  func.func @transform_5(%arg0: i32) -> (i32, i32) {
    %c0_i32 = arith.constant 0 : i32
    %c0_i32_0 = arith.constant 0 : i32
    return %c0_i32, %arg0 : i32, i32
  }
}

</mosaic_0001>

<llo_original>
// kernel: tpu_custom_call.1
$region0: #{tpu_custom_call.1}
  #allocation0 [shape = 'u32[]', space=smem, size = 0x4, offset = 0x4, fixed_abs, tag = 'smem constant byte address 0x4 - core index']
  #allocation1 [shape = 'u32[144,128]{1,0:T(1,128)}', space=vmem, size = 0x12000, scoped, tag = 'internal scratch']
  %s0 = inlined_call_operand.hbm [shape: f32[32,256], index: 0, kind: input, shape index: {}]
  %s1 = inlined_call_operand.vmem [shape: f32[256,32], index: 1, kind: output, shape index: {}]
  %s2 = sld [smem:[#allocation0]]
  $region18: #{tpu_custom_call.1} parent=0
    _
  %s4 = ssub.s32 1, %s2
  %s5 = scalar_select 0, %s4, %s2
  $region1: #{tpu_custom_call.1} parent=0
    #allocation2 [shape = 'u8[32768]{0}', space=vmem, size = 0x8000, scoped, tag = 'input window, operand 0, single buffered']
    #allocation3 [shape = 's32[1]{0}', space=sflag, size = 0x4, scoped, tag = 'scoped memory for tpu_custom_call.1']
    %6 = vsyncpa [#allocation3], 0
    // Predicated region
    $region2: #{tpu_custom_call.1} parent=1 // pred_check
      _
    $region3: #{tpu_custom_call.1} parent=1 // pred_check_branch
      %8 = sbr.rel (0) target = $region5
    $region4: #{tpu_custom_call.1} parent=1 // pred_region
      %s10 = ssub.s32 1024, 1024
      %11 = vsyncadd [#allocation3], %s10
      %s12 = sshll.u32 [#allocation2], 4
      %s13 = int_to_ptr.vmem [resolvable:$true] %s12
      %18 = dma.hbm_to_vmem [thread:$0]  %s0, 1024, %s13, [#allocation3], 256, 256, 16
    $region5: #{tpu_custom_call.1} parent=1 // pred_fallthru
      _
    // Predicated region
    $region6: #{tpu_custom_call.1} parent=1 // pred_check
      _
    $region7: #{tpu_custom_call.1} parent=1 // pred_check_branch
      %20 = sbr.rel (0) target = $region9
    $region8: #{tpu_custom_call.1} parent=1 // pred_region
      %21 = dma.done [#allocation3], 1024
    $region9: #{tpu_custom_call.1} parent=1 // pred_fallthru
      _
    %v22 = vld [vmem:[#allocation2] sm:$0xff]
    %v23 = vld [vmem:[#allocation2 + $0x8] sm:$0xff]
    %v24 = vld [vmem:[#allocation2 + $0x10] sm:$0xff]
    %v25 = vld [vmem:[#allocation2 + $0x18] sm:$0xff]
    %v26 = vld [vmem:[#allocation2 + $0x20] sm:$0xff]
    %v27 = vld [vmem:[#allocation2 + $0x28] sm:$0xff]
    %v28 = vld [vmem:[#allocation2 + $0x30] sm:$0xff]
    %v29 = vld [vmem:[#allocation2 + $0x38] sm:$0xff]
    %30 = vxpose.xlu0.b32.start [1/16] %v22, 128
    %31 = vxpose.xlu0.b32.cont [2/16] %v24, 128
    %32 = vxpose.xlu0.b32.cont [3/16] %v26, 128
    %33 = vxpose.xlu0.b32.cont [4/16] %v28, 128
    %34 = vxpose.xlu0.b32.cont [5/16] 0.0, 128
    %35 = vxpose.xlu0.b32.cont [6/16] 0.0, 128
    %36 = vxpose.xlu0.b32.cont [7/16] 0.0, 128
    %37 = vxpose.xlu0.b32.cont [8/16] 0.0, 128
    %38 = vxpose.xlu0.b32.cont [9/16] 0.0, 128
    %39 = vxpose.xlu0.b32.cont [10/16] 0.0, 128
    %40 = vxpose.xlu0.b32.cont [11/16] 0.0, 128
    %41 = vxpose.xlu0.b32.cont [12/16] 0.0, 128
    %42 = vxpose.xlu0.b32.cont [13/16] 0.0, 128
    %43 = vxpose.xlu0.b32.cont [14/16] 0.0, 128
    %44 = vxpose.xlu0.b32.cont [15/16] 0.0, 128
    %45 = vxpose.xlu0.b32.end [16/16] 0.0, 128
    %v46 = vpop.trf.xlu0
    %v47 = vpop.trf.xlu0
    %v48 = vpop.trf.xlu0
    %v49 = vpop.trf.xlu0
    %v50 = vpop.trf.xlu0
    %v51 = vpop.trf.xlu0
    %v52 = vpop.trf.xlu0
    %v53 = vpop.trf.xlu0
    %v54 = vpop.trf.xlu0
    %v55 = vpop.trf.xlu0
    %v56 = vpop.trf.xlu0
    %v57 = vpop.trf.xlu0
    %v58 = vpop.trf.xlu0
    %v59 = vpop.trf.xlu0
    %v60 = vpop.trf.xlu0
    %v61 = vpop.trf.xlu0
    %62 = vxpose.xlu0.b32.start [1/16] %v23, 128
    %63 = vxpose.xlu0.b32.cont [2/16] %v25, 128
    %64 = vxpose.xlu0.b32.cont [3/16] %v27, 128
    %65 = vxpose.xlu0.b32.cont [4/16] %v29, 128
    %66 = vxpose.xlu0.b32.cont [5/16] 0.0, 128
    %67 = vxpose.xlu0.b32.cont [6/16] 0.0, 128
    %68 = vxpose.xlu0.b32.cont [7/16] 0.0, 128
    %69 = vxpose.xlu0.b32.cont [8/16] 0.0, 128
    %70 = vxpose.xlu0.b32.cont [9/16] 0.0, 128
    %71 = vxpose.xlu0.b32.cont [10/16] 0.0, 128
    %72 = vxpose.xlu0.b32.cont [11/16] 0.0, 128
    %73 = vxpose.xlu0.b32.cont [12/16] 0.0, 128
    %74 = vxpose.xlu0.b32.cont [13/16] 0.0, 128
    %75 = vxpose.xlu0.b32.cont [14/16] 0.0, 128
    %76 = vxpose.xlu0.b32.cont [15/16] 0.0, 128
    %77 = vxpose.xlu0.b32.end [16/16] 0.0, 128
    %v78 = vpop.trf.xlu0
    %v79 = vpop.trf.xlu0
    %v80 = vpop.trf.xlu0
    %v81 = vpop.trf.xlu0
    %v82 = vpop.trf.xlu0
    %v83 = vpop.trf.xlu0
    %v84 = vpop.trf.xlu0
    %v85 = vpop.trf.xlu0
    %v86 = vpop.trf.xlu0
    %v87 = vpop.trf.xlu0
    %v88 = vpop.trf.xlu0
    %v89 = vpop.trf.xlu0
    %v90 = vpop.trf.xlu0
    %v91 = vpop.trf.xlu0
    %v92 = vpop.trf.xlu0
    %v93 = vpop.trf.xlu0
    %vm94 = vcmask 261120
    %95 = vst.msk [vmem:[%s1] sm:$0xff] %vm94, %v46
    %96 = vst.msk [vmem:[%s1 + $0x8] sm:$0xff] %vm94, %v47
    %97 = vst.msk [vmem:[%s1 + $0x10] sm:$0xff] %vm94, %v48
    %98 = vst.msk [vmem:[%s1 + $0x18] sm:$0xff] %vm94, %v49
    %99 = vst.msk [vmem:[%s1 + $0x20] sm:$0xff] %vm94, %v50
    %100 = vst.msk [vmem:[%s1 + $0x28] sm:$0xff] %vm94, %v51
    %101 = vst.msk [vmem:[%s1 + $0x30] sm:$0xff] %vm94, %v52
    %102 = vst.msk [vmem:[%s1 + $0x38] sm:$0xff] %vm94, %v53
    %103 = vst.msk [vmem:[%s1 + $0x40] sm:$0xff] %vm94, %v54
    %104 = vst.msk [vmem:[%s1 + $0x48] sm:$0xff] %vm94, %v55
    %105 = vst.msk [vmem:[%s1 + $0x50] sm:$0xff] %vm94, %v56
    %106 = vst.msk [vmem:[%s1 + $0x58] sm:$0xff] %vm94, %v57
    %107 = vst.msk [vmem:[%s1 + $0x60] sm:$0xff] %vm94, %v58
    %108 = vst.msk [vmem:[%s1 + $0x68] sm:$0xff] %vm94, %v59
    %109 = vst.msk [vmem:[%s1 + $0x70] sm:$0xff] %vm94, %v60
    %110 = vst.msk [vmem:[%s1 + $0x78] sm:$0xff] %vm94, %v61
    %111 = vst.msk [vmem:[%s1 + $0x80] sm:$0xff] %vm94, %v78
    %112 = vst.msk [vmem:[%s1 + $0x88] sm:$0xff] %vm94, %v79
    %113 = vst.msk [vmem:[%s1 + $0x90] sm:$0xff] %vm94, %v80
    %114 = vst.msk [vmem:[%s1 + $0x98] sm:$0xff] %vm94, %v81
    %115 = vst.msk [vmem:[%s1 + $0xa0] sm:$0xff] %vm94, %v82
    %116 = vst.msk [vmem:[%s1 + $0xa8] sm:$0xff] %vm94, %v83
    %117 = vst.msk [vmem:[%s1 + $0xb0] sm:$0xff] %vm94, %v84
    %118 = vst.msk [vmem:[%s1 + $0xb8] sm:$0xff] %vm94, %v85
    %119 = vst.msk [vmem:[%s1 + $0xc0] sm:$0xff] %vm94, %v86
    %120 = vst.msk [vmem:[%s1 + $0xc8] sm:$0xff] %vm94, %v87
    %121 = vst.msk [vmem:[%s1 + $0xd0] sm:$0xff] %vm94, %v88
    %122 = vst.msk [vmem:[%s1 + $0xd8] sm:$0xff] %vm94, %v89
    %123 = vst.msk [vmem:[%s1 + $0xe0] sm:$0xff] %vm94, %v90
    %124 = vst.msk [vmem:[%s1 + $0xe8] sm:$0xff] %vm94, %v91
    %125 = vst.msk [vmem:[%s1 + $0xf0] sm:$0xff] %vm94, %v92
    %126 = vst.msk [vmem:[%s1 + $0xf8] sm:$0xff] %vm94, %v93
    // Predicated region
    $region10: #{tpu_custom_call.1} parent=1 // pred_check
      _
    $region11: #{tpu_custom_call.1} parent=1 // pred_check_branch
      %128 = sbr.rel (0) target = $region13
    $region12: #{tpu_custom_call.1} parent=1 // pred_region
      _
    $region13: #{tpu_custom_call.1} parent=1 // pred_fallthru
      _
    // Predicated region
    $region14: #{tpu_custom_call.1} parent=1 // pred_check
      _
    $region15: #{tpu_custom_call.1} parent=1 // pred_check_branch
      %130 = sbr.rel (0) target = $region17
    $region16: #{tpu_custom_call.1} parent=1 // pred_region
      _
    $region17: #{tpu_custom_call.1} parent=1 // pred_fallthru
      _
    %131 = vsyncpa [#allocation3], 1

// kernel: tpu_custom_call.1
$region0: #{tpu_custom_call.1}
  #allocation0 [shape = 'u32[]', space=smem, size = 0x4, offset = 0x4, fixed_abs, tag = 'smem constant byte address 0x4 - core index']
  #allocation1 [shape = 'u32[144,128]{1,0:T(1,128)}', space=vmem, size = 0x12000, scoped, tag = 'internal scratch']
  %s0 = inlined_call_operand.vmem [shape: f32[4,256], index: 0, kind: input, shape index: {}]
  %s1 = inlined_call_operand.vmem [shape: f32[32,4], index: 1, kind: input, shape index: {}]
  %s2 = inlined_call_operand.vmem [shape: f32[32,1], index: 2, kind: input, shape index: {}]
  %s3 = inlined_call_operand.vmem [shape: f32[2,32,32], index: 3, kind: input, shape index: {}]
  %s4 = inlined_call_operand.vmem [shape: f32[2,32,1], index: 4, kind: input, shape index: {}]
  %s5 = inlined_call_operand.hbm [shape: f32[32,256], index: 5, kind: output, shape index: {}]
  %s6 = sld [smem:[#allocation0]]
  $region53: #{tpu_custom_call.1} parent=0
    _
  %s8 = ssub.s32 1, %s6
  %s9 = scalar_select 0, %s8, %s6
  $region1: #{tpu_custom_call.1} parent=0
    #allocation2 [shape = 'u8[32768]{0}', space=vmem, size = 0x8000, scoped, tag = 'output window, operand 0']
    #allocation3 [shape = 's32[2]{0}', space=sflag, size = 0x8, scoped, tag = 'scoped memory for tpu_custom_call.1']
    %10 = vsyncpa [#allocation3], 0
    %s11 = scalar_lea.sflag [#allocation3], 1
    %12 = vsyncpa %s11, 0
    loop: start=0, step=1, limit=4
    $region2: #{tpu_custom_call.1} parent=1 // loop_pre_header
      _
    $region3: #{tpu_custom_call.1} parent=1 // loop_header
      %s14 = sphi 0, %s18
      %p15 = scmp.ge.s32.totalorder %s14, 4
      %s24 = sphi 0, %s26
      %s27 = sphi 0, %s24
      %s28 = sphi 0, %s27
      %s44 = sphi 0, %s28
      %s48 = sphi 0, %s48
      %s50 = sphi 0, %s48
      %s51 = sphi 0, %s50
      %s65 = sphi 0, %s51
      %s69 = sphi 0, %s69
      %s71 = sphi 0, %s69
      %s72 = sphi 0, %s71
      %s86 = sphi 0, %s72
      %s90 = sphi 0, %s90
      %s92 = sphi 0, %s90
      %s93 = sphi 0, %s92
      %s107 = sphi 0, %s93
      %s111 = sphi 0, %s111
      %s113 = sphi 0, %s111
      %s114 = sphi 0, %s113
      %s128 = sphi 0, %s114
      %s134 = sphi 0, %s136
      %s137 = sphi 0, %s134
      %s138 = sphi 0, %s137
      %s154 = sphi 0, %s138
    $region4: #{tpu_custom_call.1} parent=1 // loop_header_branch
      %17 = sbr.rel (%p15) target = $region8
    $region5: #{tpu_custom_call.1} parent=1 // loop_body
      %s19 = ssub.s32 %s14, 1
      %s20 = ssub.s32 %s14, 2
      %s21 = sadd.s32 %s14, 1
      %s22 = ssub.s32 %s14, %s21
      %p23 = scmp.eq.s32.totalorder %s22, 0
      %s25 = sadd.s32 %s24, 1
      %s26 = scalar_select %p23, %s24, %s25
      %p29 = pneg %p23
      %p30 = scmp.eq.s32.totalorder %s14, 1
      %p31 = por %p29, %p30
      %p32 = scmp.ne.s32.totalorder %s24, %s27
      %p33 = scmp.eq.s32.totalorder %s14, 0
      %p34 = por %p32, %p33
      %p35 = scmp.ne.s32.totalorder %s24, %s27
      %p36 = scmp.eq.s32.totalorder %s19, 1
      %p37 = por %p35, %p36
      %p38 = scmp.ne.s32.totalorder %s27, %s28
      %p39 = scmp.eq.s32.totalorder %s19, 0
      %p40 = por %p38, %p39
      %p41 = scmp.ne.s32.totalorder %s27, %s28
      %p42 = scmp.eq.s32.totalorder %s20, 1
      %p43 = por %p41, %p42
      %p45 = scmp.ne.s32.totalorder %s28, %s44
      %p46 = scmp.eq.s32.totalorder %s20, 0
      %p47 = por %p45, %p46
      %s49 = sadd.s32 %s48, 1
      %p52 = scmp.eq.s32.totalorder %s14, 1
      %p53 = scmp.ne.s32.totalorder %s48, %s50
      %p54 = scmp.eq.s32.totalorder %s14, 0
      %p55 = por %p53, %p54
      %p56 = scmp.ne.s32.totalorder %s48, %s50
      %p57 = scmp.eq.s32.totalorder %s19, 1
      %p58 = por %p56, %p57
      %p59 = scmp.ne.s32.totalorder %s50, %s51
      %p60 = scmp.eq.s32.totalorder %s19, 0
      %p61 = por %p59, %p60
      %p62 = scmp.ne.s32.totalorder %s50, %s51
      %p63 = scmp.eq.s32.totalorder %s20, 1
      %p64 = por %p62, %p63
      %p66 = scmp.ne.s32.totalorder %s51, %s65
      %p67 = scmp.eq.s32.totalorder %s20, 0
      %p68 = por %p66, %p67
      %s70 = sadd.s32 %s69, 1
      %p73 = scmp.eq.s32.totalorder %s14, 1
      %p74 = scmp.ne.s32.totalorder %s69, %s71
      %p75 = scmp.eq.s32.totalorder %s14, 0
      %p76 = por %p74, %p75
      %p77 = scmp.ne.s32.totalorder %s69, %s71
      %p78 = scmp.eq.s32.totalorder %s19, 1
      %p79 = por %p77, %p78
      %p80 = scmp.ne.s32.totalorder %s71, %s72
      %p81 = scmp.eq.s32.totalorder %s19, 0
      %p82 = por %p80, %p81
      %p83 = scmp.ne.s32.totalorder %s71, %s72
      %p84 = scmp.eq.s32.totalorder %s20, 1
      %p85 = por %p83, %p84
      %p87 = scmp.ne.s32.totalorder %s72, %s86
      %p88 = scmp.eq.s32.totalorder %s20, 0
      %p89 = por %p87, %p88
      %s91 = sadd.s32 %s90, 1
      %p94 = scmp.eq.s32.totalorder %s14, 1
      %p95 = scmp.ne.s32.totalorder %s90, %s92
      %p96 = scmp.eq.s32.totalorder %s14, 0
      %p97 = por %p95, %p96
      %p98 = scmp.ne.s32.totalorder %s90, %s92
      %p99 = scmp.eq.s32.totalorder %s19, 1
      %p100 = por %p98, %p99
      %p101 = scmp.ne.s32.totalorder %s92, %s93
      %p102 = scmp.eq.s32.totalorder %s19, 0
      %p103 = por %p101, %p102
      %p104 = scmp.ne.s32.totalorder %s92, %s93
      %p105 = scmp.eq.s32.totalorder %s20, 1
      %p106 = por %p104, %p105
      %p108 = scmp.ne.s32.totalorder %s93, %s107
      %p109 = scmp.eq.s32.totalorder %s20, 0
      %p110 = por %p108, %p109
      %s112 = sadd.s32 %s111, 1
      %p115 = scmp.eq.s32.totalorder %s14, 1
      %p116 = scmp.ne.s32.totalorder %s111, %s113
      %p117 = scmp.eq.s32.totalorder %s14, 0
      %p118 = por %p116, %p117
      %p119 = scmp.ne.s32.totalorder %s111, %s113
      %p120 = scmp.eq.s32.totalorder %s19, 1
      %p121 = por %p119, %p120
      %p122 = scmp.ne.s32.totalorder %s113, %s114
      %p123 = scmp.eq.s32.totalorder %s19, 0
      %p124 = por %p122, %p123
      %p125 = scmp.ne.s32.totalorder %s113, %s114
      %p126 = scmp.eq.s32.totalorder %s20, 1
      %p127 = por %p125, %p126
      %p129 = scmp.ne.s32.totalorder %s114, %s128
      %p130 = scmp.eq.s32.totalorder %s20, 0
      %p131 = por %p129, %p130
      %s132 = ssub.s32 %s14, %s21
      %p133 = scmp.eq.s32.totalorder %s132, 0
      %s135 = sadd.s32 %s134, 1
      %s136 = scalar_select %p133, %s134, %s135
      %p139 = pneg %p133
      %p140 = scmp.eq.s32.totalorder %s14, 1
      %p141 = por %p139, %p140
      %p142 = scmp.ne.s32.totalorder %s134, %s137
      %p143 = scmp.eq.s32.totalorder %s14, 0
      %p144 = por %p142, %p143
      %p145 = scmp.ne.s32.totalorder %s134, %s137
      %p146 = scmp.eq.s32.totalorder %s19, 1
      %p147 = por %p145, %p146
      %p148 = scmp.ne.s32.totalorder %s137, %s138
      %p149 = scmp.eq.s32.totalorder %s19, 0
      %p150 = por %p148, %p149
      %p151 = scmp.ne.s32.totalorder %s137, %s138
      %p152 = scmp.eq.s32.totalorder %s20, 1
      %p153 = por %p151, %p152
      %p155 = scmp.ne.s32.totalorder %s138, %s154
      %p156 = scmp.eq.s32.totalorder %s20, 0
      %p157 = por %p155, %p156
      %p158 = scmp.le.s32.totalorder 1, %s14
      %p159 = scmp.lt.s32.totalorder %s14, 3
      %p160 = pnand %p158, %p159
      %p161 = pneg %p160
      // Predicated region
      $region9: #{tpu_custom_call.1} parent=5 // pred_check
        _
      $region10: #{tpu_custom_call.1} parent=5 // pred_check_branch
        %163 = sbr.rel (%p160) target = $region12
      $region11: #{tpu_custom_call.1} parent=5 // pred_region
        %s164 = ssub.s32 %s14, 1
        // Predicated region
        $region13: #{tpu_custom_call.1} parent=11 // pred_check
          %p165 = pneg %p61
        $region14: #{tpu_custom_call.1} parent=11 // pred_check_branch
          %167 = sbr.rel (%p165) target = $region16
        $region15: #{tpu_custom_call.1} parent=11 // pred_region
          _
        $region16: #{tpu_custom_call.1} parent=11 // pred_fallthru
          _
        // Predicated region
        $region17: #{tpu_custom_call.1} parent=11 // pred_check
          %p168 = pneg %p82
        $region18: #{tpu_custom_call.1} parent=11 // pred_check_branch
          %170 = sbr.rel (%p168) target = $region20
        $region19: #{tpu_custom_call.1} parent=11 // pred_region
          _
        $region20: #{tpu_custom_call.1} parent=11 // pred_fallthru
          _
        // Predicated region
        $region21: #{tpu_custom_call.1} parent=11 // pred_check
          %p171 = pneg %p103
        $region22: #{tpu_custom_call.1} parent=11 // pred_check_branch
          %173 = sbr.rel (%p171) target = $region24
        $region23: #{tpu_custom_call.1} parent=11 // pred_region
          _
        $region24: #{tpu_custom_call.1} parent=11 // pred_fallthru
          _
        // Predicated region
        $region25: #{tpu_custom_call.1} parent=11 // pred_check
          %p174 = pneg %p124
        $region26: #{tpu_custom_call.1} parent=11 // pred_check_branch
          %176 = sbr.rel (%p174) target = $region28
        $region27: #{tpu_custom_call.1} parent=11 // pred_region
          _
        $region28: #{tpu_custom_call.1} parent=11 // pred_fallthru
          _
      $region12: #{tpu_custom_call.1} parent=5 // pred_fallthru
        _
      %p177 = scmp.lt.s32.totalorder %s14, 2
      // Predicated region
      $region29: #{tpu_custom_call.1} parent=5 // pred_check
        %p178 = pneg %p177
      $region30: #{tpu_custom_call.1} parent=5 // pred_check_branch
        %180 = sbr.rel (%p178) target = $region32
      $region31: #{tpu_custom_call.1} parent=5 // pred_region
        // Predicated region
        $region33: #{tpu_custom_call.1} parent=31 // pred_check
          %p181 = pneg %p34
        $region34: #{tpu_custom_call.1} parent=31 // pred_check_branch
          %183 = sbr.rel (%p181) target = $region36
        $region35: #{tpu_custom_call.1} parent=31 // pred_region
          %p184 = scmp.lt.s32.totalorder %s14, 1
          %s185 = scalar_select %p184, %s14, 1
          %s186 = smul.addr %s185, 4
          %s187 = scalar_lea.vmem %s0, %s186
        $region36: #{tpu_custom_call.1} parent=31 // pred_fallthru
          _
      $region32: #{tpu_custom_call.1} parent=5 // pred_fallthru
        _
      %p188 = scmp.le.s32.totalorder 1, %s14
      %p189 = scmp.lt.s32.totalorder %s14, 3
      %p190 = pnand %p188, %p189
      %p191 = pneg %p190
      // Predicated region
      $region37: #{tpu_custom_call.1} parent=5 // pred_check
        _
      $region38: #{tpu_custom_call.1} parent=5 // pred_check_branch
        %193 = sbr.rel (%p190) target = $region40
      $region39: #{tpu_custom_call.1} parent=5 // pred_region
        %s194 = ssub.s32 %s14, 1
        %p195 = scmp.lt.s32.totalorder %s19, 1
        %s196 = scalar_select %p195, %s19, 1
        %s197 = smul.addr %s196, 4
        %s198 = scalar_lea.vmem %s0, %s197
        %p199 = pneg %p40
        %p200 = pneg %p37
        %p201 = pneg %p61
        %p202 = pneg %p58
        %p203 = pneg %p82
        %p204 = pneg %p79
        %p205 = pneg %p103
        %p206 = pneg %p100
        %p207 = pneg %p124
        %p208 = pneg %p121
        %p209 = pneg %p150
        %p210 = pneg %p147
        %s211 = sand.u32 %s137, 1
        %s212 = scalar_lea.sflag [#allocation3], %s211
        %s213 = sand.u32 %s137, 1
        %s214 = smul.addr %s213, 32
        %s215 = scalar_lea.vmem [#allocation2], %s214
        %p216 = scmp.lt.s32.totalorder %s19, 1
        %s217 = scalar_select %p216, %s19, 1
        %s218 = smul.addr %s217, 4
        %s219 = scalar_lea.vmem %s0, %s218
        %v220 = vld [vmem:[%s219] sm:$0xf]
        %v221 = vld [vmem:[%s1] sm:$0xff]
        %v222 = vld [vmem:[%s1 + $0x8] sm:$0xff]
        %v223 = vld [vmem:[%s1 + $0x10] sm:$0xff]
        %v224 = vld [vmem:[%s1 + $0x18] sm:$0xff]
        %v225 = vld [vmem:[%s2] sm:$0xff]
        %v226 = vld [vmem:[%s2 + $0x8] sm:$0xff]
        %v227 = vld [vmem:[%s2 + $0x10] sm:$0xff]
        %v228 = vld [vmem:[%s2 + $0x18] sm:$0xff]
        %230 = vset.pattern.permute.xlu0 0
        %231 = vperm.xlu0 %230, %v225
        %v232 = vpop.permute.xlu0 %231
        %235 = vset.pattern.permute.xlu0 0
        %236 = vperm.xlu0 %235, %v226
        %v237 = vpop.permute.xlu0 %236
        %240 = vset.pattern.permute.xlu0 0
        %241 = vperm.xlu0 %240, %v227
        %v242 = vpop.permute.xlu0 %241
        %245 = vset.pattern.permute.xlu0 0
        %246 = vperm.xlu0 %245, %v228
        %v247 = vpop.permute.xlu0 %246
        %vm249 = vcmask 31744
        %v251 = vsel %vm249, %v221, 0
        %v254 = vsel %vm249, %v222, 0
        %v257 = vsel %vm249, %v223, 0
        %v260 = vsel %vm249, %v224, 0
        %vm262 = vcmask 1043456
        %v264 = vsel %vm262, %v220, 0
        %266 = vmatprep.subr.mxu0 0.0
        %267 = vmatpush1.msra.mxu0 0.0
        %268 = vmatprep.subr.mxu0 0.0
        %269 = vmatpush1.msra.mxu0 0.0
        %270 = vmatprep.subr.mxu0 0.0
        %271 = vmatpush1.msra.mxu0 0.0
        %272 = vmatprep.subr.mxu0 0.0
        %273 = vmatpush1.msra.mxu0 0.0
        %274 = vmatprep.subr.mxu0 0.0
        %275 = vmatpush1.msra.mxu0 0.0
        %276 = vmatprep.subr.mxu0 0.0
        %277 = vmatpush1.msra.mxu0 0.0
        %278 = vmatprep.subr.mxu0 0.0
        %279 = vmatpush1.msra.mxu0 0.0
        %280 = vmatprep.subr.mxu0 0.0
        %281 = vmatpush1.msra.mxu0 0.0
        %282 = vmatprep.subr.mxu0 0.0
        %283 = vmatpush1.msra.mxu0 0.0
        %284 = vmatprep.subr.mxu0 0.0
        %285 = vmatpush1.msra.mxu0 0.0
        %286 = vmatprep.subr.mxu0 0.0
        %287 = vmatpush1.msra.mxu0 0.0
        %288 = vmatprep.subr.mxu0 0.0
        %289 = vmatpush1.msra.mxu0 0.0
        %290 = vmatprep.subr.mxu0 0.0
        %291 = vmatpush1.msra.mxu0 0.0
        %292 = vmatprep.subr.mxu0 0.0
        %293 = vmatpush1.msra.mxu0 0.0
        %294 = vmatprep.subr.mxu0 0.0
        %295 = vmatpush1.msra.mxu0 0.0
        %296 = vmatprep.subr.mxu0 0.0
        %297 = vmatpush1.msra.mxu0 %v264
        %298 = vmatprep.subr.mxu0 0.0
        %299 = vmatpush2.msra.mxu0 0.0
        %300 = vmatprep.subr.mxu0 0.0
        %301 = vmatpush2.msra.mxu0 0.0
        %302 = vmatprep.subr.mxu0 0.0
        %303 = vmatpush2.msra.mxu0 0.0
        %304 = vmatprep.subr.mxu0 0.0
        %305 = vmatpush2.msra.mxu0 0.0
        %306 = vmatprep.subr.mxu0 0.0
        %307 = vmatpush2.msra.mxu0 0.0
        %308 = vmatprep.subr.mxu0 0.0
        %309 = vmatpush2.msra.mxu0 0.0
        %310 = vmatprep.subr.mxu0 0.0
        %311 = vmatpush2.msra.mxu0 0.0
        %312 = vmatprep.subr.mxu0 0.0
        %313 = vmatpush2.msra.mxu0 0.0
        %314 = vmatprep.subr.mxu0 0.0
        %315 = vmatpush2.msra.mxu0 0.0
        %316 = vmatprep.subr.mxu0 0.0
        %317 = vmatpush2.msra.mxu0 0.0
        %318 = vmatprep.subr.mxu0 0.0
        %319 = vmatpush2.msra.mxu0 0.0
        %320 = vmatprep.subr.mxu0 0.0
        %321 = vmatpush2.msra.mxu0 0.0
        %322 = vmatprep.subr.mxu0 0.0
        %323 = vmatpush2.msra.mxu0 0.0
        %324 = vmatprep.subr.mxu0 0.0
        %325 = vmatpush2.msra.mxu0 0.0
        %326 = vmatprep.subr.mxu0 0.0
        %327 = vmatpush2.msra.mxu0 0.0
        %328 = vmatprep.subr.mxu0 0.0
        %329 = vmatpush2.msra.mxu0 0.0
        %330 = vmatprep.mubr.f32.mxu0 0.0
        %331 = vmatmul.mubr.f32.gmra.mxu0 %v251
        %v332 = vpop.f32.mrf.mxu0
        %v333 = vadd.f32 %v232, %v332
        %v334 = vpop.f32.mrf.mxu0
        %335 = vmatprep.mubr.f32.mxu0 0.0
        %336 = vmatmul.mubr.f32.gmra.mxu0 %v254
        %v337 = vpop.f32.mrf.mxu0
        %v338 = vadd.f32 %v237, %v337
        %v339 = vpop.f32.mrf.mxu0
        %340 = vmatprep.mubr.f32.mxu0 0.0
        %341 = vmatmul.mubr.f32.gmra.mxu0 %v257
        %v342 = vpop.f32.mrf.mxu0
        %v343 = vadd.f32 %v242, %v342
        %v344 = vpop.f32.mrf.mxu0
        %345 = vmatprep.mubr.f32.mxu0 0.0
        %346 = vmatmul.mubr.f32.gmra.mxu0 %v260
        %v347 = vpop.f32.mrf.mxu0
        %v348 = vadd.f32 %v247, %v347
        %v349 = vpop.f32.mrf.mxu0
        %350 = vdwg.mxu0
        %v351 = vand.u32 2147483647, %v333
        %v352 = vand.u32 2147483647, %v338
        %v353 = vand.u32 2147483647, %v343
        %v354 = vand.u32 2147483647, %v348
        %v355 = vmul.f32 %v351, -2.0
        %v356 = vmul.f32 %v352, -2.0
        %v357 = vmul.f32 %v353, -2.0
        %v358 = vmul.f32 %v354, -2.0
        %v359 = vmul.f32 %v355, 1.442695
        %v360 = vpow.pop %v359
        %v361 = vmul.f32 %v356, 1.442695
        %v362 = vpow.pop %v361
        %v363 = vmul.f32 %v357, 1.442695
        %v364 = vpow.pop %v363
        %v365 = vmul.f32 %v358, 1.442695
        %v366 = vpow.pop %v365
        %v367 = vadd.f32 %v360, 1.0
        %v368 = vlog2.pop %v367
        %v369 = vmul.f32 %v368, 0.6931472
        %v370 = vmul.f32 -0.5, %v360
        %v371 = vadd.f32 %v370, 1.0
        %v372 = vmul.f32 %v371, %v360
        %v373 = vand.u32 2147483647, %v360
        %vm374 = vcmp.lt.f32.partialorder %v373, 0.0004427343
        %v375 = vsel %vm374, %v372, %v369
        %v376 = vadd.f32 %v362, 1.0
        %v377 = vlog2.pop %v376
        %v378 = vmul.f32 %v377, 0.6931472
        %v379 = vmul.f32 -0.5, %v362
        %v380 = vadd.f32 %v379, 1.0
        %v381 = vmul.f32 %v380, %v362
        %v382 = vand.u32 2147483647, %v362
        %vm383 = vcmp.lt.f32.partialorder %v382, 0.0004427343
        %v384 = vsel %vm383, %v381, %v378
        %v385 = vadd.f32 %v364, 1.0
        %v386 = vlog2.pop %v385
        %v387 = vmul.f32 %v386, 0.6931472
        %v388 = vmul.f32 -0.5, %v364
        %v389 = vadd.f32 %v388, 1.0
        %v390 = vmul.f32 %v389, %v364
        %v391 = vand.u32 2147483647, %v364
        %vm392 = vcmp.lt.f32.partialorder %v391, 0.0004427343
        %v393 = vsel %vm392, %v390, %v387
        %v394 = vadd.f32 %v366, 1.0
        %v395 = vlog2.pop %v394
        %v396 = vmul.f32 %v395, 0.6931472
        %v397 = vmul.f32 -0.5, %v366
        %v398 = vadd.f32 %v397, 1.0
        %v399 = vmul.f32 %v398, %v366
        %v400 = vand.u32 2147483647, %v366
        %vm401 = vcmp.lt.f32.partialorder %v400, 0.0004427343
        %v402 = vsel %vm401, %v399, %v396
        %v403 = vadd.f32 %v351, %v375
        %v404 = vadd.f32 %v352, %v384
        %v405 = vadd.f32 %v353, %v393
        %v406 = vadd.f32 %v354, %v402
        %v407 = vld [vmem:[%s3] sm:$0xff]
        %v408 = vld [vmem:[%s3 + $0x8] sm:$0xff]
        %v409 = vld [vmem:[%s3 + $0x10] sm:$0xff]
        %v410 = vld [vmem:[%s3 + $0x18] sm:$0xff]
        %v411 = vld [vmem:[%s4] sm:$0xff]
        %v412 = vld [vmem:[%s4 + $0x8] sm:$0xff]
        %v413 = vld [vmem:[%s4 + $0x10] sm:$0xff]
        %v414 = vld [vmem:[%s4 + $0x18] sm:$0xff]
        %416 = vset.pattern.permute.xlu0 0
        %417 = vperm.xlu0 %416, %v411
        %v418 = vpop.permute.xlu0 %417
        %421 = vset.pattern.permute.xlu0 0
        %422 = vperm.xlu0 %421, %v412
        %v423 = vpop.permute.xlu0 %422
        %426 = vset.pattern.permute.xlu0 0
        %427 = vperm.xlu0 %426, %v413
        %v428 = vpop.permute.xlu0 %427
        %431 = vset.pattern.permute.xlu0 0
        %432 = vperm.xlu0 %431, %v414
        %v433 = vpop.permute.xlu0 %432
        %vm435 = vcmask 261120
        %v437 = vsel %vm435, %v407, 0
        %v440 = vsel %vm435, %v408, 0
        %v443 = vsel %vm435, %v409, 0
        %v446 = vsel %vm435, %v410, 0
        %448 = vmatprep.subr.mxu0 0.0
        %449 = vmatpush1.msra.mxu0 0.0
        %450 = vmatprep.subr.mxu0 0.0
        %451 = vmatpush1.msra.mxu0 0.0
        %452 = vmatprep.subr.mxu0 0.0
        %453 = vmatpush1.msra.mxu0 0.0
        %454 = vmatprep.subr.mxu0 0.0
        %455 = vmatpush1.msra.mxu0 0.0
        %456 = vmatprep.subr.mxu0 0.0
        %457 = vmatpush1.msra.mxu0 0.0
        %458 = vmatprep.subr.mxu0 0.0
        %459 = vmatpush1.msra.mxu0 0.0
        %460 = vmatprep.subr.mxu0 0.0
        %461 = vmatpush1.msra.mxu0 0.0
        %462 = vmatprep.subr.mxu0 0.0
        %463 = vmatpush1.msra.mxu0 0.0
        %464 = vmatprep.subr.mxu0 0.0
        %465 = vmatpush1.msra.mxu0 0.0
        %466 = vmatprep.subr.mxu0 0.0
        %467 = vmatpush1.msra.mxu0 0.0
        %468 = vmatprep.subr.mxu0 0.0
        %469 = vmatpush1.msra.mxu0 0.0
        %470 = vmatprep.subr.mxu0 0.0
        %471 = vmatpush1.msra.mxu0 0.0
        %472 = vmatprep.subr.mxu0 0.0
        %473 = vmatpush1.msra.mxu0 %v406
        %474 = vmatprep.subr.mxu0 0.0
        %475 = vmatpush1.msra.mxu0 %v405
        %476 = vmatprep.subr.mxu0 0.0
        %477 = vmatpush1.msra.mxu0 %v404
        %478 = vmatprep.subr.mxu0 0.0
        %479 = vmatpush1.msra.mxu0 %v403
        %480 = vmatprep.subr.mxu0 0.0
        %481 = vmatpush2.msra.mxu0 0.0
        %482 = vmatprep.subr.mxu0 0.0
        %483 = vmatpush2.msra.mxu0 0.0
        %484 = vmatprep.subr.mxu0 0.0
        %485 = vmatpush2.msra.mxu0 0.0
        %486 = vmatprep.subr.mxu0 0.0
        %487 = vmatpush2.msra.mxu0 0.0
        %488 = vmatprep.subr.mxu0 0.0
        %489 = vmatpush2.msra.mxu0 0.0
        %490 = vmatprep.subr.mxu0 0.0
        %491 = vmatpush2.msra.mxu0 0.0
        %492 = vmatprep.subr.mxu0 0.0
        %493 = vmatpush2.msra.mxu0 0.0
        %494 = vmatprep.subr.mxu0 0.0
        %495 = vmatpush2.msra.mxu0 0.0
        %496 = vmatprep.subr.mxu0 0.0
        %497 = vmatpush2.msra.mxu0 0.0
        %498 = vmatprep.subr.mxu0 0.0
        %499 = vmatpush2.msra.mxu0 0.0
        %500 = vmatprep.subr.mxu0 0.0
        %501 = vmatpush2.msra.mxu0 0.0
        %502 = vmatprep.subr.mxu0 0.0
        %503 = vmatpush2.msra.mxu0 0.0
        %504 = vmatprep.subr.mxu0 0.0
        %505 = vmatpush2.msra.mxu0 0.0
        %506 = vmatprep.subr.mxu0 0.0
        %507 = vmatpush2.msra.mxu0 0.0
        %508 = vmatprep.subr.mxu0 0.0
        %509 = vmatpush2.msra.mxu0 0.0
        %510 = vmatprep.subr.mxu0 0.0
        %511 = vmatpush2.msra.mxu0 0.0
        %512 = vmatprep.mubr.f32.mxu0 0.0
        %513 = vmatmul.mubr.f32.gmra.mxu0 %v437
        %v514 = vpop.f32.mrf.mxu0
        %v515 = vadd.f32 %v418, %v514
        %v516 = vpop.f32.mrf.mxu0
        %517 = vmatprep.mubr.f32.mxu0 0.0
        %518 = vmatmul.mubr.f32.gmra.mxu0 %v440
        %v519 = vpop.f32.mrf.mxu0
        %v520 = vadd.f32 %v423, %v519
        %v521 = vpop.f32.mrf.mxu0
        %522 = vmatprep.mubr.f32.mxu0 0.0
        %523 = vmatmul.mubr.f32.gmra.mxu0 %v443
        %v524 = vpop.f32.mrf.mxu0
        %v525 = vadd.f32 %v428, %v524
        %v526 = vpop.f32.mrf.mxu0
        %527 = vmatprep.mubr.f32.mxu0 0.0
        %528 = vmatmul.mubr.f32.gmra.mxu0 %v446
        %v529 = vpop.f32.mrf.mxu0
        %v530 = vadd.f32 %v433, %v529
        %v531 = vpop.f32.mrf.mxu0
        %532 = vdwg.mxu0
        %v533 = vand.u32 2147483647, %v515
        %v534 = vand.u32 2147483647, %v520
        %v535 = vand.u32 2147483647, %v525
        %v536 = vand.u32 2147483647, %v530
        %v537 = vmul.f32 %v533, -2.0
        %v538 = vmul.f32 %v534, -2.0
        %v539 = vmul.f32 %v535, -2.0
        %v540 = vmul.f32 %v536, -2.0
        %v541 = vmul.f32 %v537, 1.442695
        %v542 = vpow.pop %v541
        %v543 = vmul.f32 %v538, 1.442695
        %v544 = vpow.pop %v543
        %v545 = vmul.f32 %v539, 1.442695
        %v546 = vpow.pop %v545
        %v547 = vmul.f32 %v540, 1.442695
        %v548 = vpow.pop %v547
        %v549 = vadd.f32 %v542, 1.0
        %v550 = vlog2.pop %v549
        %v551 = vmul.f32 %v550, 0.6931472
        %v552 = vmul.f32 -0.5, %v542
        %v553 = vadd.f32 %v552, 1.0
        %v554 = vmul.f32 %v553, %v542
        %v555 = vand.u32 2147483647, %v542
        %vm556 = vcmp.lt.f32.partialorder %v555, 0.0004427343
        %v557 = vsel %vm556, %v554, %v551
        %v558 = vadd.f32 %v544, 1.0
        %v559 = vlog2.pop %v558
        %v560 = vmul.f32 %v559, 0.6931472
        %v561 = vmul.f32 -0.5, %v544
        %v562 = vadd.f32 %v561, 1.0
        %v563 = vmul.f32 %v562, %v544
        %v564 = vand.u32 2147483647, %v544
        %vm565 = vcmp.lt.f32.partialorder %v564, 0.0004427343
        %v566 = vsel %vm565, %v563, %v560
        %v567 = vadd.f32 %v546, 1.0
        %v568 = vlog2.pop %v567
        %v569 = vmul.f32 %v568, 0.6931472
        %v570 = vmul.f32 -0.5, %v546
        %v571 = vadd.f32 %v570, 1.0
        %v572 = vmul.f32 %v571, %v546
        %v573 = vand.u32 2147483647, %v546
        %vm574 = vcmp.lt.f32.partialorder %v573, 0.0004427343
        %v575 = vsel %vm574, %v572, %v569
        %v576 = vadd.f32 %v548, 1.0
        %v577 = vlog2.pop %v576
        %v578 = vmul.f32 %v577, 0.6931472
        %v579 = vmul.f32 -0.5, %v548
        %v580 = vadd.f32 %v579, 1.0
        %v581 = vmul.f32 %v580, %v548
        %v582 = vand.u32 2147483647, %v548
        %vm583 = vcmp.lt.f32.partialorder %v582, 0.0004427343
        %v584 = vsel %vm583, %v581, %v578
        %v585 = vadd.f32 %v533, %v557
        %v586 = vadd.f32 %v534, %v566
        %v587 = vadd.f32 %v535, %v575
        %v588 = vadd.f32 %v536, %v584
        %v589 = vmul.f32 %v585, 0.5
        %v590 = vmul.f32 %v586, 0.5
        %v591 = vmul.f32 %v587, 0.5
        %v592 = vmul.f32 %v588, 0.5
        %v593 = vadd.f32 %v403, %v589
        %v594 = vadd.f32 %v404, %v590
        %v595 = vadd.f32 %v405, %v591
        %v596 = vadd.f32 %v406, %v592
        %s597 = scalar_lea.vmem %s3, 32
        %v598 = vld [vmem:[%s597] sm:$0xff]
        %v599 = vld [vmem:[%s597 + $0x8] sm:$0xff]
        %v600 = vld [vmem:[%s597 + $0x10] sm:$0xff]
        %v601 = vld [vmem:[%s597 + $0x18] sm:$0xff]
        %s602 = scalar_lea.vmem %s4, 32
        %v603 = vld [vmem:[%s602] sm:$0xff]
        %v604 = vld [vmem:[%s602 + $0x8] sm:$0xff]
        %v605 = vld [vmem:[%s602 + $0x10] sm:$0xff]
        %v606 = vld [vmem:[%s602 + $0x18] sm:$0xff]
        %608 = vset.pattern.permute.xlu0 0
        %609 = vperm.xlu0 %608, %v603
        %v610 = vpop.permute.xlu0 %609
        %613 = vset.pattern.permute.xlu0 0
        %614 = vperm.xlu0 %613, %v604
        %v615 = vpop.permute.xlu0 %614
        %618 = vset.pattern.permute.xlu0 0
        %619 = vperm.xlu0 %618, %v605
        %v620 = vpop.permute.xlu0 %619
        %623 = vset.pattern.permute.xlu0 0
        %624 = vperm.xlu0 %623, %v606
        %v625 = vpop.permute.xlu0 %624
        %v628 = vsel %vm435, %v598, 0
        %v631 = vsel %vm435, %v599, 0
        %v634 = vsel %vm435, %v600, 0
        %v637 = vsel %vm435, %v601, 0
        %639 = vmatprep.subr.mxu0 0.0
        %640 = vmatpush1.msra.mxu0 0.0
        %641 = vmatprep.subr.mxu0 0.0
        %642 = vmatpush1.msra.mxu0 0.0
        %643 = vmatprep.subr.mxu0 0.0
        %644 = vmatpush1.msra.mxu0 0.0
        %645 = vmatprep.subr.mxu0 0.0
        %646 = vmatpush1.msra.mxu0 0.0
        %647 = vmatprep.subr.mxu0 0.0
        %648 = vmatpush1.msra.mxu0 0.0
        %649 = vmatprep.subr.mxu0 0.0
        %650 = vmatpush1.msra.mxu0 0.0
        %651 = vmatprep.subr.mxu0 0.0
        %652 = vmatpush1.msra.mxu0 0.0
        %653 = vmatprep.subr.mxu0 0.0
        %654 = vmatpush1.msra.mxu0 0.0
        %655 = vmatprep.subr.mxu0 0.0
        %656 = vmatpush1.msra.mxu0 0.0
        %657 = vmatprep.subr.mxu0 0.0
        %658 = vmatpush1.msra.mxu0 0.0
        %659 = vmatprep.subr.mxu0 0.0
        %660 = vmatpush1.msra.mxu0 0.0
        %661 = vmatprep.subr.mxu0 0.0
        %662 = vmatpush1.msra.mxu0 0.0
        %663 = vmatprep.subr.mxu0 0.0
        %664 = vmatpush1.msra.mxu0 %v596
        %665 = vmatprep.subr.mxu0 0.0
        %666 = vmatpush1.msra.mxu0 %v595
        %667 = vmatprep.subr.mxu0 0.0
        %668 = vmatpush1.msra.mxu0 %v594
        %669 = vmatprep.subr.mxu0 0.0
        %670 = vmatpush1.msra.mxu0 %v593
        %671 = vmatprep.subr.mxu0 0.0
        %672 = vmatpush2.msra.mxu0 0.0
        %673 = vmatprep.subr.mxu0 0.0
        %674 = vmatpush2.msra.mxu0 0.0
        %675 = vmatprep.subr.mxu0 0.0
        %676 = vmatpush2.msra.mxu0 0.0
        %677 = vmatprep.subr.mxu0 0.0
        %678 = vmatpush2.msra.mxu0 0.0
        %679 = vmatprep.subr.mxu0 0.0
        %680 = vmatpush2.msra.mxu0 0.0
        %681 = vmatprep.subr.mxu0 0.0
        %682 = vmatpush2.msra.mxu0 0.0
        %683 = vmatprep.subr.mxu0 0.0
        %684 = vmatpush2.msra.mxu0 0.0
        %685 = vmatprep.subr.mxu0 0.0
        %686 = vmatpush2.msra.mxu0 0.0
        %687 = vmatprep.subr.mxu0 0.0
        %688 = vmatpush2.msra.mxu0 0.0
        %689 = vmatprep.subr.mxu0 0.0
        %690 = vmatpush2.msra.mxu0 0.0
        %691 = vmatprep.subr.mxu0 0.0
        %692 = vmatpush2.msra.mxu0 0.0
        %693 = vmatprep.subr.mxu0 0.0
        %694 = vmatpush2.msra.mxu0 0.0
        %695 = vmatprep.subr.mxu0 0.0
        %696 = vmatpush2.msra.mxu0 0.0
        %697 = vmatprep.subr.mxu0 0.0
        %698 = vmatpush2.msra.mxu0 0.0
        %699 = vmatprep.subr.mxu0 0.0
        %700 = vmatpush2.msra.mxu0 0.0
        %701 = vmatprep.subr.mxu0 0.0
        %702 = vmatpush2.msra.mxu0 0.0
        %703 = vmatprep.mubr.f32.mxu0 0.0
        %704 = vmatmul.mubr.f32.gmra.mxu0 %v628
        %v705 = vpop.f32.mrf.mxu0
        %v706 = vadd.f32 %v610, %v705
        %v707 = vpop.f32.mrf.mxu0
        %708 = vmatprep.mubr.f32.mxu0 0.0
        %709 = vmatmul.mubr.f32.gmra.mxu0 %v631
        %v710 = vpop.f32.mrf.mxu0
        %v711 = vadd.f32 %v615, %v710
        %v712 = vpop.f32.mrf.mxu0
        %713 = vmatprep.mubr.f32.mxu0 0.0
        %714 = vmatmul.mubr.f32.gmra.mxu0 %v634
        %v715 = vpop.f32.mrf.mxu0
        %v716 = vadd.f32 %v620, %v715
        %v717 = vpop.f32.mrf.mxu0
        %718 = vmatprep.mubr.f32.mxu0 0.0
        %719 = vmatmul.mubr.f32.gmra.mxu0 %v637
        %v720 = vpop.f32.mrf.mxu0
        %v721 = vadd.f32 %v625, %v720
        %v722 = vpop.f32.mrf.mxu0
        %723 = vdwg.mxu0
        %v724 = vand.u32 2147483647, %v706
        %v725 = vand.u32 2147483647, %v711
        %v726 = vand.u32 2147483647, %v716
        %v727 = vand.u32 2147483647, %v721
        %v728 = vmul.f32 %v724, -2.0
        %v729 = vmul.f32 %v725, -2.0
        %v730 = vmul.f32 %v726, -2.0
        %v731 = vmul.f32 %v727, -2.0
        %v732 = vmul.f32 %v728, 1.442695
        %v733 = vpow.pop %v732
        %v734 = vmul.f32 %v729, 1.442695
        %v735 = vpow.pop %v734
        %v736 = vmul.f32 %v730, 1.442695
        %v737 = vpow.pop %v736
        %v738 = vmul.f32 %v731, 1.442695
        %v739 = vpow.pop %v738
        %v740 = vadd.f32 %v733, 1.0
        %v741 = vlog2.pop %v740
        %v742 = vmul.f32 %v741, 0.6931472
        %v743 = vmul.f32 -0.5, %v733
        %v744 = vadd.f32 %v743, 1.0
        %v745 = vmul.f32 %v744, %v733
        %v746 = vand.u32 2147483647, %v733
        %vm747 = vcmp.lt.f32.partialorder %v746, 0.0004427343
        %v748 = vsel %vm747, %v745, %v742
        %v749 = vadd.f32 %v735, 1.0
        %v750 = vlog2.pop %v749
        %v751 = vmul.f32 %v750, 0.6931472
        %v752 = vmul.f32 -0.5, %v735
        %v753 = vadd.f32 %v752, 1.0
        %v754 = vmul.f32 %v753, %v735
        %v755 = vand.u32 2147483647, %v735
        %vm756 = vcmp.lt.f32.partialorder %v755, 0.0004427343
        %v757 = vsel %vm756, %v754, %v751
        %v758 = vadd.f32 %v737, 1.0
        %v759 = vlog2.pop %v758
        %v760 = vmul.f32 %v759, 0.6931472
        %v761 = vmul.f32 -0.5, %v737
        %v762 = vadd.f32 %v761, 1.0
        %v763 = vmul.f32 %v762, %v737
        %v764 = vand.u32 2147483647, %v737
        %vm765 = vcmp.lt.f32.partialorder %v764, 0.0004427343
        %v766 = vsel %vm765, %v763, %v760
        %v767 = vadd.f32 %v739, 1.0
        %v768 = vlog2.pop %v767
        %v769 = vmul.f32 %v768, 0.6931472
        %v770 = vmul.f32 -0.5, %v739
        %v771 = vadd.f32 %v770, 1.0
        %v772 = vmul.f32 %v771, %v739
        %v773 = vand.u32 2147483647, %v739
        %vm774 = vcmp.lt.f32.partialorder %v773, 0.0004427343
        %v775 = vsel %vm774, %v772, %v769
        %v776 = vadd.f32 %v724, %v748
        %v777 = vadd.f32 %v725, %v757
        %v778 = vadd.f32 %v726, %v766
        %v779 = vadd.f32 %v727, %v775
        %v780 = vmul.f32 %v776, 0.5
        %v781 = vmul.f32 %v777, 0.5
        %v782 = vmul.f32 %v778, 0.5
        %v783 = vmul.f32 %v779, 0.5
        %v784 = vadd.f32 %v593, %v780
        %v785 = vadd.f32 %v594, %v781
        %v786 = vadd.f32 %v595, %v782
        %v787 = vadd.f32 %v596, %v783
        %788 = vst [vmem:[%s215] sm:$0xff] %v784
        %789 = vst [vmem:[%s215 + $0x8] sm:$0xff] %v785
        %790 = vst [vmem:[%s215 + $0x10] sm:$0xff] %v786
        %791 = vst [vmem:[%s215 + $0x18] sm:$0xff] %v787
        %s792 = sand.u32 %s137, 1
        %s793 = scalar_lea.sflag [#allocation3], %s792
        %s794 = sand.u32 %s137, 1
        %s795 = smul.addr %s794, 32
        %s796 = scalar_lea.vmem [#allocation2], %s795
        // Predicated region
        $region41: #{tpu_custom_call.1} parent=39 // pred_check
          %p797 = pneg %p147
        $region42: #{tpu_custom_call.1} parent=39 // pred_check_branch
          %799 = sbr.rel (%p797) target = $region44
        $region43: #{tpu_custom_call.1} parent=39 // pred_region
          %s801 = ssub.s32 512, 512
          %802 = vsyncadd %s793, %s801
          %s803 = smul.addr %s19, 128
          %s804 = scalar_lea.hbm %s5, %s803
          %s805 = sshll.u32 %s796, 4
          %s806 = int_to_ptr.vmem [resolvable:$true] %s805
          %811 = dma.vmem_to_hbm [thread:$0]  %s806, 512, %s804, %s793, 128, 256, 8
        $region44: #{tpu_custom_call.1} parent=39 // pred_fallthru
          _
      $region40: #{tpu_custom_call.1} parent=5 // pred_fallthru
        _
      %p812 = scmp.le.s32.totalorder 2, %s14
      // Predicated region
      $region45: #{tpu_custom_call.1} parent=5 // pred_check
        %p813 = pneg %p812
      $region46: #{tpu_custom_call.1} parent=5 // pred_check_branch
        %815 = sbr.rel (%p813) target = $region48
      $region47: #{tpu_custom_call.1} parent=5 // pred_region
        %s816 = ssub.s32 %s14, 2
        // Predicated region
        $region49: #{tpu_custom_call.1} parent=47 // pred_check
          %p817 = pneg %p153
        $region50: #{tpu_custom_call.1} parent=47 // pred_check_branch
          %819 = sbr.rel (%p817) target = $region52
        $region51: #{tpu_custom_call.1} parent=47 // pred_region
          %s820 = sand.u32 %s138, 1
          %s821 = scalar_lea.sflag [#allocation3], %s820
          %s822 = sand.u32 %s138, 1
          %s823 = smul.addr %s822, 32
          %s824 = scalar_lea.vmem [#allocation2], %s823
          %825 = dma.done %s821, 512
        $region52: #{tpu_custom_call.1} parent=47 // pred_fallthru
          _
      $region48: #{tpu_custom_call.1} parent=5 // pred_fallthru
        _
    $region6: #{tpu_custom_call.1} parent=1 // loop_footer
      %s18 = sadd.s32 1, %s14
    $region7: #{tpu_custom_call.1} parent=1 // loop_footer_branch
      %13 = sbr.rel target = $region3
    $region8: #{tpu_custom_call.1} parent=1 // loop_exit
      _
    %826 = vsyncpa [#allocation3], 1
    %s827 = scalar_lea.sflag [#allocation3], 1
    %828 = vsyncpa %s827, 1

</llo_original>
